<compile_context>
chip_gen: v7x
topology: tpu7x:2x2x1
jax: 0.10.0
libtpu: 0.0.40
codegen_flags: <defaults>
</compile_context>

<pallas_src>
import jax
import jax.numpy as jnp
from jax.experimental import pallas as pl
from jax.experimental.pallas import tpu as pltpu

_LANES = 128


def _sublane_align(dtype) -> int:
    # 8 rows/vreg for 4-byte dtypes, 16 for 2-byte, 32 for 1-byte.
    itemsize = jnp.dtype(dtype).itemsize
    return max(8, 32 // max(itemsize, 1))


def _e_relu_kernel(e_ref, x_ref, o_ref):
    x = x_ref[...]
    e = e_ref[0].astype(x.dtype)          # scalar from SMEM, broadcast on the VPU
    o_ref[...] = jnp.maximum(x, jnp.zeros((), x.dtype)) + e


def _reference(x, e):
    return jnp.maximum(x, jnp.zeros((), x.dtype)) + jnp.asarray(e, x.dtype)


def e_relu(
    x: jax.Array,
    e: float = 1e-6,
    *,
    target_block_bytes: int = 8 * 1024 * 1024,
    min_pallas_bytes: int = 512 * 1024,
) -> jax.Array:
    """Pallas implementation of relu(x) + e (elementwise, any shape)."""
    dtype = x.dtype
    n = x.size
    itemsize = jnp.dtype(dtype).itemsize

    # Small-input / degenerate fast path: launch overhead dominates.
    if x.ndim == 0 or n == 0 or n * itemsize < min_pallas_bytes:
        return _reference(x, e)

    # Chip-aware VMEM budget (v7x has 64 MiB, v5e/v6e have 128 MiB).
    try:
        vmem_cap = int(pltpu.get_tpu_info().vmem_capacity_bytes)
    except Exception:
        vmem_cap = 64 << 20  # conservative (v7x-safe) fallback
    vmem_budget = max(vmem_cap - (16 << 20), 16 << 20)   # leave reserve for the compiler
    headroom = 8 << 20
    max_block_bytes = max((vmem_budget - headroom) // 4, 256 * 1024)  # 2 bufs x (in+out)
    block_target = min(int(target_block_bytes), max_block_bytes)

    align = _sublane_align(dtype)
    last = x.shape[-1]
    rows = n // last

    # Lane (minor-dim) tiling: keep the original minor dim whenever possible so
    # the leading-dim collapse below is layout-preserving (no relayout pass).
    if last % _LANES == 0 and last * itemsize > block_target:
        tile_cols = max(_LANES, (block_target // itemsize) // _LANES * _LANES)
        tile_cols = min(tile_cols, last)
    else:
        tile_cols = last
    if tile_cols * itemsize > max_block_bytes:
        # A single (non-128-divisible) row would not fit a double-buffered
        # block in VMEM; plain XLA is already one fused HBM pass here.
        return _reference(x, e)

    # Sublane (row) tiling: multi-MiB blocks to amortize per-grid-step overhead.
    bytes_per_row = tile_cols * itemsize
    cand = max(align, (block_target // bytes_per_row) // align * align)
    tile_rows = rows if cand >= rows else cand
    grid_rows = pl.cdiv(rows, tile_rows)
    grid_cols = pl.cdiv(last, tile_cols)
    if grid_rows * grid_cols == 1 and rows >= 2 * align:
        # Ensure >= 2 blocks so both v7x TensorCores get work.
        tile_rows = pl.cdiv(pl.cdiv(rows, 2), align) * align
        grid_rows = pl.cdiv(rows, tile_rows)

    block_bytes = tile_rows * tile_cols * itemsize
    vmem_limit = int(min(4 * block_bytes + headroom, vmem_budget))

    # Leading-dim collapse only (minor dim untouched) -> no relayout around the call.
    x2d = x.reshape(rows, last)
    e_arr = jnp.asarray(e, jnp.float32).reshape(1)   # tiny SMEM operand, no recompile per e

    out2d = pl.pallas_call(
        _e_relu_kernel,
        out_shape=jax.ShapeDtypeStruct((rows, last), dtype),
        grid_spec=pltpu.PrefetchScalarGridSpec(
            num_scalar_prefetch=0,
            grid=(grid_rows, grid_cols),
            in_specs=[
                pl.BlockSpec(memory_space=pltpu.MemorySpace.SMEM),
                pl.BlockSpec((tile_rows, tile_cols), lambda i, j: (i, j)),
            ],
            out_specs=pl.BlockSpec((tile_rows, tile_cols), lambda i, j: (i, j)),
        ),
        compiler_params=pltpu.CompilerParams(
            dimension_semantics=("parallel", "parallel"),
            vmem_limit_bytes=vmem_limit,
        ),
    )(e_arr, x2d)

    return out2d.reshape(x.shape)


if __name__ == "__main__":
    key = jax.random.PRNGKey(0)
    e = 1e-6

    # 1) Small NCHW input via the public API (takes the jnp fast path).
    x_small = jax.random.normal(key, (2, 4, 16, 16), dtype=jnp.float32)
    out_small = jax.block_until_ready(e_relu(x_small, e=e))
    ref_small = _reference(x_small, e)
    assert out_small.shape == x_small.shape and out_small.dtype == x_small.dtype
    assert jnp.allclose(out_small, ref_small, atol=1e-7), "fast-path mismatch"

    # 2) Same small input forced through Pallas (non-128 minor dim ->
    #    full-last-dim blocks, no padding, partial blocks masked).
    out_forced = jax.block_until_ready(e_relu(x_small, e=e, min_pallas_bytes=0))
    assert jnp.allclose(out_forced, ref_small, atol=1e-7), "pallas (minor=16) mismatch"

    # 3) 128-divisible minor dim; small block target forces a multi-step grid.
    x_lane = jax.random.normal(key, (2, 8, 32, 128), dtype=jnp.float32)
    out_lane = jax.block_until_ready(
        e_relu(x_lane, e=e, min_pallas_bytes=0, target_block_bytes=64 * 1024)
    )
    assert jnp.allclose(out_lane, _reference(x_lane, e), atol=1e-7), "multi-block mismatch"

    # 4) Odd, non-128-divisible element count: no pad/slice, boundary masking only.
    x_odd = jax.random.normal(key, (3, 5, 7, 11), dtype=jnp.float32)
    out_odd = jax.block_until_ready(e_relu(x_odd, e=e, min_pallas_bytes=0))
    assert jnp.allclose(out_odd, _reference(x_odd, e), atol=1e-7), "odd-shape mismatch"

    # 5) bf16 path (16-row sublane packing) with the two-core grid split.
    x_bf16 = jax.random.normal(key, (4, 16, 256), dtype=jnp.bfloat16)
    out_bf16 = jax.block_until_ready(e_relu(x_bf16, e=e, min_pallas_bytes=0))
    assert jnp.allclose(
        out_bf16.astype(jnp.float32),
        _reference(x_bf16, e).astype(jnp.float32),
        atol=1e-2,
    ), "bf16 mismatch"

    print("KERNEL_OK")
</pallas_src>

<mosaic_0001>
module attributes {stable_mosaic.version = 11 : i64} {
  func.func @_e_relu_kernel(%arg0: i32, %arg1: i32, %arg2: memref<1xf32, #tpu.memory_space<smem>>, %arg3: memref<64x16xf32, #tpu.memory_space<vmem>>, %arg4: memref<64x16xf32, #tpu.memory_space<vmem>>) attributes {dimension_semantics = [#tpu.dimension_semantics<parallel>, #tpu.dimension_semantics<parallel>], iteration_bounds = array<i64: 2, 1>, scalar_prefetch = 0 : i64, scratch_operands = 0 : i64, tpu.core_type = #tpu.core_type<tc>, window_params = [{transform_indices = @transform_0, window_bounds = array<i64: 1>}, {transform_indices = @transform_1, window_bounds = array<i64: 64, 16>}, {transform_indices = @transform_2, window_bounds = array<i64: 64, 16>}]} {
    %c0 = arith.constant 0 : index
    %c0_0 = arith.constant 0 : index
    %0 = vector.load %arg3[%c0, %c0_0] : memref<64x16xf32, #tpu.memory_space<vmem>>, vector<64x16xf32>
    %c0_1 = arith.constant 0 : index
    %1 = memref.load %arg2[%c0_1] : memref<1xf32, #tpu.memory_space<smem>>
    %cst = arith.constant 0.000000e+00 : f32
    %2 = vector.broadcast %cst : f32 to vector<64x16xf32>
    %3 = arith.maximumf %0, %2 : vector<64x16xf32>
    %4 = vector.broadcast %1 : f32 to vector<64x16xf32>
    %5 = arith.addf %3, %4 : vector<64x16xf32>
    %c0_2 = arith.constant 0 : index
    %c0_3 = arith.constant 0 : index
    %6 = vector.load %arg4[%c0_2, %c0_3] : memref<64x16xf32, #tpu.memory_space<vmem>>, vector<64x16xf32>
    tpu.vector_store %arg4[%c0_2, %c0_3], %5 {strides = array<i32>} : memref<64x16xf32, #tpu.memory_space<vmem>>, vector<64x16xf32>,
    return
  }
  func.func @transform_0(%arg0: i32, %arg1: i32) -> i32 {
    %c0_i32 = arith.constant 0 : i32
    %c0_i32_0 = arith.constant 0 : i32
    return %c0_i32 : i32
  }
  func.func @transform_1(%arg0: i32, %arg1: i32) -> (i32, i32) {
    %c0_i32 = arith.constant 0 : i32
    return %arg0, %arg1 : i32, i32
  }
  func.func @transform_2(%arg0: i32, %arg1: i32) -> (i32, i32) {
    %c0_i32 = arith.constant 0 : i32
    return %arg0, %arg1 : i32, i32
  }
}

</mosaic_0001>

<llo_original>
// kernel: tpu_custom_call.1
$region0: #{tpu_custom_call.1}
  #allocation0 [shape = 'u32[]', space=smem, size = 0x4, offset = 0x4, fixed_abs, tag = 'smem constant byte address 0x4 - core index']
  #allocation1 [shape = 'u32[144,128]{1,0:T(1,128)}', space=vmem, size = 0x12000, scoped, tag = 'internal scratch']
  #allocation2 [shape = 'f32[1]{0:T(128)S(6)}', space=smem, size = 0x200, scoped, tag = 'scoped memory for tpu_custom_call.1']
  %s0 = inlined_call_operand.<no memory space> [shape: f32[1], index: 0, kind: input, shape index: {}]
  %s1 = inlined_call_operand.vmem [shape: f32[128,16], index: 1, kind: input, shape index: {}]
  %s2 = inlined_call_operand.vmem [shape: f32[128,16], index: 2, kind: output, shape index: {}]
  %s3 = sld [smem:[#allocation0]]
  $region41: #{tpu_custom_call.1} parent=0
    _
  %s5 = ssub.s32 1, %s3
  %s6 = scalar_select 0, %s5, %s3
  %7 = sst [smem:[#allocation2]] %s0
  loop: start=0, step=1, limit=4
  $region2: #{tpu_custom_call.1} parent=0 // loop_pre_header
    _
  $region3: #{tpu_custom_call.1} parent=0 // loop_header
    %s9 = sphi 0, %s13
    %p10 = scmp.ge.s32.totalorder %s9, 4
    %s16 = sphi 0, %s28
    %s17 = sphi 0, %s24
    %s18 = sphi 0, %s16
    %s19 = sphi 0, %s17
    %s20 = sphi 0, %s18
    %s21 = sphi 0, %s19
    %s29 = sphi 0, %s29
    %s31 = sphi 0, %s29
    %s32 = sphi 0, %s31
    %s46 = sphi 0, %s32
    %s54 = sphi 0, %s56
    %s57 = sphi 0, %s54
    %s58 = sphi 0, %s57
    %s74 = sphi 0, %s58
    %s82 = sphi 0, %s84
    %s85 = sphi 0, %s82
    %s86 = sphi 0, %s85
    %s102 = sphi 0, %s86
  $region4: #{tpu_custom_call.1} parent=0 // loop_header_branch
    %12 = sbr.rel (%p10) target = $region8
  $region5: #{tpu_custom_call.1} parent=0 // loop_body
    %s14 = ssub.s32 %s9, 1
    %s15 = ssub.s32 %s9, 2
    %s22 = sadd.s32 1, %s17
    %p23 = scmp.ge.s32.totalorder %s22, 1
    %s24 = scalar_select %p23, 0, %s22
    %s25 = sadd.s32 1, %s16
    %s26 = scalar_select %p23, %s25, %s16
    %p27 = scmp.ge.s32.totalorder %s26, 2
    %s28 = scalar_select %p27, 0, %s26
    %s30 = sadd.s32 %s29, 1
    %p33 = scmp.eq.s32.totalorder %s9, 1
    %p34 = scmp.ne.s32.totalorder %s29, %s31
    %p35 = scmp.eq.s32.totalorder %s9, 0
    %p36 = por %p34, %p35
    %p37 = scmp.ne.s32.totalorder %s29, %s31
    %p38 = scmp.eq.s32.totalorder %s14, 1
    %p39 = por %p37, %p38
    %p40 = scmp.ne.s32.totalorder %s31, %s32
    %p41 = scmp.eq.s32.totalorder %s14, 0
    %p42 = por %p40, %p41
    %p43 = scmp.ne.s32.totalorder %s31, %s32
    %p44 = scmp.eq.s32.totalorder %s15, 1
    %p45 = por %p43, %p44
    %p47 = scmp.ne.s32.totalorder %s32, %s46
    %p48 = scmp.eq.s32.totalorder %s15, 0
    %p49 = por %p47, %p48
    %s50 = ssub.s32 %s16, %s28
    %s51 = ssub.s32 %s17, %s24
    %s52 = sor.u32 %s50, %s51
    %p53 = scmp.eq.s32.totalorder %s52, 0
    %s55 = sadd.s32 %s54, 1
    %s56 = scalar_select %p53, %s54, %s55
    %p59 = pneg %p53
    %p60 = scmp.eq.s32.totalorder %s9, 1
    %p61 = por %p59, %p60
    %p62 = scmp.ne.s32.totalorder %s54, %s57
    %p63 = scmp.eq.s32.totalorder %s9, 0
    %p64 = por %p62, %p63
    %p65 = scmp.ne.s32.totalorder %s54, %s57
    %p66 = scmp.eq.s32.totalorder %s14, 1
    %p67 = por %p65, %p66
    %p68 = scmp.ne.s32.totalorder %s57, %s58
    %p69 = scmp.eq.s32.totalorder %s14, 0
    %p70 = por %p68, %p69
    %p71 = scmp.ne.s32.totalorder %s57, %s58
    %p72 = scmp.eq.s32.totalorder %s15, 1
    %p73 = por %p71, %p72
    %p75 = scmp.ne.s32.totalorder %s58, %s74
    %p76 = scmp.eq.s32.totalorder %s15, 0
    %p77 = por %p75, %p76
    %s78 = ssub.s32 %s16, %s28
    %s79 = ssub.s32 %s17, %s24
    %s80 = sor.u32 %s78, %s79
    %p81 = scmp.eq.s32.totalorder %s80, 0
    %s83 = sadd.s32 %s82, 1
    %s84 = scalar_select %p81, %s82, %s83
    %p87 = pneg %p81
    %p88 = scmp.eq.s32.totalorder %s9, 1
    %p89 = por %p87, %p88
    %p90 = scmp.ne.s32.totalorder %s82, %s85
    %p91 = scmp.eq.s32.totalorder %s9, 0
    %p92 = por %p90, %p91
    %p93 = scmp.ne.s32.totalorder %s82, %s85
    %p94 = scmp.eq.s32.totalorder %s14, 1
    %p95 = por %p93, %p94
    %p96 = scmp.ne.s32.totalorder %s85, %s86
    %p97 = scmp.eq.s32.totalorder %s14, 0
    %p98 = por %p96, %p97
    %p99 = scmp.ne.s32.totalorder %s85, %s86
    %p100 = scmp.eq.s32.totalorder %s15, 1
    %p101 = por %p99, %p100
    %p103 = scmp.ne.s32.totalorder %s86, %s102
    %p104 = scmp.eq.s32.totalorder %s15, 0
    %p105 = por %p103, %p104
    %p106 = scmp.le.s32.totalorder 1, %s9
    %p107 = scmp.lt.s32.totalorder %s9, 3
    %p108 = pnand %p106, %p107
    %p109 = pneg %p108
    // Predicated region
    $region9: #{tpu_custom_call.1} parent=5 // pred_check
      _
    $region10: #{tpu_custom_call.1} parent=5 // pred_check_branch
      %111 = sbr.rel (%p108) target = $region12
    $region11: #{tpu_custom_call.1} parent=5 // pred_region
      %s112 = ssub.s32 %s9, 1
      // Predicated region
      $region13: #{tpu_custom_call.1} parent=11 // pred_check
        %p113 = pneg %p42
      $region14: #{tpu_custom_call.1} parent=11 // pred_check_branch
        %115 = sbr.rel (%p113) target = $region16
      $region15: #{tpu_custom_call.1} parent=11 // pred_region
        _
      $region16: #{tpu_custom_call.1} parent=11 // pred_fallthru
        _
    $region12: #{tpu_custom_call.1} parent=5 // pred_fallthru
      _
    %p116 = scmp.lt.s32.totalorder %s9, 2
    // Predicated region
    $region17: #{tpu_custom_call.1} parent=5 // pred_check
      %p117 = pneg %p116
    $region18: #{tpu_custom_call.1} parent=5 // pred_check_branch
      %119 = sbr.rel (%p117) target = $region20
    $region19: #{tpu_custom_call.1} parent=5 // pred_region
      // Predicated region
      $region21: #{tpu_custom_call.1} parent=19 // pred_check
        %p120 = pneg %p64
      $region22: #{tpu_custom_call.1} parent=19 // pred_check_branch
        %122 = sbr.rel (%p120) target = $region24
      $region23: #{tpu_custom_call.1} parent=19 // pred_region
        %s123 = smul.u32 8, %s16
        %p124 = scmp.lt.s32.totalorder %s123, 15
        %s125 = scalar_select %p124, %s123, 15
        %p126 = scmp.lt.s32.totalorder %s17, 0
        %s127 = scalar_select %p126, %s17, 0
        %s128 = sadd.s32 %s127, %s125
        %s129 = smul.addr %s128, 8
        %s130 = scalar_lea.vmem %s1, %s129
        %s131 = smul.u32 8, %s16
      $region24: #{tpu_custom_call.1} parent=19 // pred_fallthru
        _
    $region20: #{tpu_custom_call.1} parent=5 // pred_fallthru
      _
    %p132 = scmp.le.s32.totalorder 1, %s9
    %p133 = scmp.lt.s32.totalorder %s9, 3
    %p134 = pnand %p132, %p133
    %p135 = pneg %p134
    // Predicated region
    $region25: #{tpu_custom_call.1} parent=5 // pred_check
      _
    $region26: #{tpu_custom_call.1} parent=5 // pred_check_branch
      %137 = sbr.rel (%p134) target = $region28
    $region27: #{tpu_custom_call.1} parent=5 // pred_region
      %s138 = ssub.s32 %s9, 1
      %p139 = pneg %p42
      %p140 = pneg %p39
      %s141 = smul.u32 8, %s18
      %p142 = scmp.lt.s32.totalorder %s141, 15
      %s143 = scalar_select %p142, %s141, 15
      %p144 = scmp.lt.s32.totalorder %s19, 0
      %s145 = scalar_select %p144, %s19, 0
      %s146 = sadd.s32 %s145, %s143
      %s147 = smul.addr %s146, 8
      %s148 = scalar_lea.vmem %s1, %s147
      %p149 = pneg %p70
      %p150 = pneg %p67
      %p151 = pneg %p98
      %p152 = pneg %p95
      %s153 = smul.u32 8, %s18
      %p154 = scmp.lt.s32.totalorder %s153, 15
      %s155 = scalar_select %p154, %s153, 15
      %p156 = scmp.lt.s32.totalorder %s19, 0
      %s157 = scalar_select %p156, %s19, 0
      %s158 = sadd.s32 %s157, %s155
      %s159 = smul.addr %s158, 8
      %s160 = scalar_lea.vmem %s2, %s159
      %s161 = smul.u32 8, %s18
      %p162 = scmp.lt.s32.totalorder %s161, 15
      %s163 = scalar_select %p162, %s161, 15
      %p164 = scmp.lt.s32.totalorder %s19, 0
      %s165 = scalar_select %p164, %s19, 0
      %s166 = sadd.s32 %s165, %s163
      %s167 = smul.addr %s166, 8
      %s168 = scalar_lea.vmem %s1, %s167
      %s169 = smul.u32 8, %s18
      %s170 = smul.u32 8, %s18
      %p171 = scmp.lt.s32.totalorder %s170, 15
      %s172 = scalar_select %p171, %s170, 15
      %p173 = scmp.lt.s32.totalorder %s19, 0
      %s174 = scalar_select %p173, %s19, 0
      %s175 = sadd.s32 %s174, %s172
      %s176 = smul.addr %s175, 8
      %s177 = scalar_lea.vmem %s2, %s176
      %s178 = smul.u32 8, %s18
      %v179 = vld [vmem:[%s168] sm:$0xff]
      %v180 = vld [vmem:[%s168 + $0x8] sm:$0xff]
      %v181 = vld [vmem:[%s168 + $0x10] sm:$0xff]
      %v182 = vld [vmem:[%s168 + $0x18] sm:$0xff]
      %v183 = vld [vmem:[%s168 + $0x20] sm:$0xff]
      %v184 = vld [vmem:[%s168 + $0x28] sm:$0xff]
      %v185 = vld [vmem:[%s168 + $0x30] sm:$0xff]
      %v186 = vld [vmem:[%s168 + $0x38] sm:$0xff]
      %s187 = sld [smem:[#allocation2]]
      %v188 = vmax.f32 %v179, 0.0
      %v189 = vmax.f32 %v180, 0.0
      %v190 = vmax.f32 %v181, 0.0
      %v191 = vmax.f32 %v182, 0.0
      %v192 = vmax.f32 %v183, 0.0
      %v193 = vmax.f32 %v184, 0.0
      %v194 = vmax.f32 %v185, 0.0
      %v195 = vmax.f32 %v186, 0.0
      %v196 = vstv %s187
      %v197 = vadd.f32 %v188, %v196
      %v198 = vadd.f32 %v189, %v196
      %v199 = vadd.f32 %v190, %v196
      %v200 = vadd.f32 %v191, %v196
      %v201 = vadd.f32 %v192, %v196
      %v202 = vadd.f32 %v193, %v196
      %v203 = vadd.f32 %v194, %v196
      %v204 = vadd.f32 %v195, %v196
      %vm205 = vcmask 130048
      %206 = vst.msk [vmem:[%s177] sm:$0xff] %vm205, %v197
      %207 = vst.msk [vmem:[%s177 + $0x8] sm:$0xff] %vm205, %v198
      %208 = vst.msk [vmem:[%s177 + $0x10] sm:$0xff] %vm205, %v199
      %209 = vst.msk [vmem:[%s177 + $0x18] sm:$0xff] %vm205, %v200
      %210 = vst.msk [vmem:[%s177 + $0x20] sm:$0xff] %vm205, %v201
      %211 = vst.msk [vmem:[%s177 + $0x28] sm:$0xff] %vm205, %v202
      %212 = vst.msk [vmem:[%s177 + $0x30] sm:$0xff] %vm205, %v203
      %213 = vst.msk [vmem:[%s177 + $0x38] sm:$0xff] %vm205, %v204
      %s214 = smul.u32 8, %s18
      %p215 = scmp.lt.s32.totalorder %s214, 15
      %s216 = scalar_select %p215, %s214, 15
      %p217 = scmp.lt.s32.totalorder %s19, 0
      %s218 = scalar_select %p217, %s19, 0
      %s219 = sadd.s32 %s218, %s216
      %s220 = smul.addr %s219, 8
      %s221 = scalar_lea.vmem %s2, %s220
      // Predicated region
      $region29: #{tpu_custom_call.1} parent=27 // pred_check
        %p222 = pneg %p95
      $region30: #{tpu_custom_call.1} parent=27 // pred_check_branch
        %224 = sbr.rel (%p222) target = $region32
      $region31: #{tpu_custom_call.1} parent=27 // pred_region
        %s225 = smul.u32 8, %s18
      $region32: #{tpu_custom_call.1} parent=27 // pred_fallthru
        _
    $region28: #{tpu_custom_call.1} parent=5 // pred_fallthru
      _
    %p226 = scmp.le.s32.totalorder 2, %s9
    // Predicated region
    $region33: #{tpu_custom_call.1} parent=5 // pred_check
      %p227 = pneg %p226
    $region34: #{tpu_custom_call.1} parent=5 // pred_check_branch
      %229 = sbr.rel (%p227) target = $region36
    $region35: #{tpu_custom_call.1} parent=5 // pred_region
      %s230 = ssub.s32 %s9, 2
      // Predicated region
      $region37: #{tpu_custom_call.1} parent=35 // pred_check
        %p231 = pneg %p101
      $region38: #{tpu_custom_call.1} parent=35 // pred_check_branch
        %233 = sbr.rel (%p231) target = $region40
      $region39: #{tpu_custom_call.1} parent=35 // pred_region
        %s234 = smul.u32 8, %s20
        %p235 = scmp.lt.s32.totalorder %s234, 15
        %s236 = scalar_select %p235, %s234, 15
        %p237 = scmp.lt.s32.totalorder %s21, 0
        %s238 = scalar_select %p237, %s21, 0
        %s239 = sadd.s32 %s238, %s236
        %s240 = smul.addr %s239, 8
        %s241 = scalar_lea.vmem %s2, %s240
      $region40: #{tpu_custom_call.1} parent=35 // pred_fallthru
        _
    $region36: #{tpu_custom_call.1} parent=5 // pred_fallthru
      _
  $region6: #{tpu_custom_call.1} parent=0 // loop_footer
    %s13 = sadd.s32 1, %s9
  $region7: #{tpu_custom_call.1} parent=0 // loop_footer_branch
    %8 = sbr.rel target = $region3
  $region8: #{tpu_custom_call.1} parent=0 // loop_exit
    _

</llo_original>
